<compile_context>
chip_gen: v6e
topology: v6e:2x2x1
jax: 0.10.0
libtpu: 0.0.40
codegen_flags: <defaults>
</compile_context>

<pallas_src>
import jax
import jax.numpy as jnp
from jax.experimental import pallas as pl
from jax.experimental.pallas import tpu as pltpu


def _round_up(n, m):
    return ((n + m - 1) // m) * m


def _fused_linear_kernel(x_ref, w_ref, b_ref, o_ref):
    # x_ref: (TM, Dp)   w_ref: (Dp, Dp) effective, contraction-ready
    # b_ref: (1, Dp)    o_ref: (TM, Dp)
    acc = jnp.dot(x_ref[...], w_ref[...], preferred_element_type=jnp.float32)
    o_ref[...] = (acc + b_ref[...]).astype(o_ref.dtype)


def fuse_params(w, b):
    """One-time precompute of the fused, padded parameters.

    w: (D, D) f32, PyTorch Linear layout (out_features, in_features)
    b: (D,)   f32 bias
    Returns (w_p, b_p): lane-dense padded effective weight (Dp, Dp) and bias (1, Dp).
    """
    D = w.shape[0]
    assert w.shape == (D, D) and b.shape == (D,)
    wt = w.T.astype(jnp.float32)                  # (in, out) contraction-ready
    w_eff = wt + wt @ wt                          # x @ W_eff == linear(linear(x)+x) weight part
    b_eff = b.astype(jnp.float32) @ wt + b.astype(jnp.float32)

    Dp = _round_up(D, 128)                        # lane axis -> multiple of 128
    w_p = jnp.zeros((Dp, Dp), jnp.float32).at[:D, :D].set(w_eff)
    b_p = jnp.zeros((1, Dp), jnp.float32).at[0, :D].set(b_eff)
    return w_p, b_p


@jax.jit
def model_forward(x, w_p, b_p):
    """Forward of the (shape-corrected) Model using the pre-fused params."""
    M, D = x.shape
    Dp = w_p.shape[0]

    # Batch tile: large enough to amortise per-grid-step overhead, small
    # fallback when M is tiny. Always a multiple of 8 (sublane granularity).
    TM = min(_round_up(M, 8), 512)
    Mp = _round_up(M, TM)
    grid_m = Mp // TM

    # Pad activations (inside jit this fuses; keeps lane axis 128-dense).
    x_p = jnp.pad(x, ((0, Mp - M), (0, Dp - D)))

    out_p = pl.pallas_call(
        _fused_linear_kernel,
        out_shape=jax.ShapeDtypeStruct((Mp, Dp), x.dtype),
        grid=(grid_m,),
        in_specs=[
            pl.BlockSpec((TM, Dp), lambda i: (i, 0)),   # x tile over batch
            pl.BlockSpec((Dp, Dp), lambda i: (0, 0)),   # fused weight (resident)
            pl.BlockSpec((1, Dp), lambda i: (0, 0)),    # fused bias row
        ],
        out_specs=pl.BlockSpec((TM, Dp), lambda i: (i, 0)),
        compiler_params=pltpu.CompilerParams(
            dimension_semantics=("parallel",),          # shards batch over TCs on v7x
        ),
    )(x_p, w_p, b_p)

    return out_p[:M, :D]


def _reference(x, w, b):
    v1 = x @ w.T + b
    v2 = v1 + x
    v3 = v2 @ w.T + b
    return v3


if __name__ == "__main__":
    # Original spec feeds x = randn(5, 3); we keep batch=5 but use D=16
    # (in_features == out_features, see NOTE above).
    M, D = 5, 16

    key = jax.random.PRNGKey(0)
    kx, kw, kb, kx2 = jax.random.split(key, 4)

    x = jax.random.normal(kx, (M, D), dtype=jnp.float32)

    # Deterministic Linear init matching nn.Linear's default scheme:
    # uniform(-1/sqrt(fan_in), 1/sqrt(fan_in)).
    bound = 1.0 / (D ** 0.5)
    w = jax.random.uniform(kw, (D, D), dtype=jnp.float32, minval=-bound, maxval=bound)
    b = jax.random.uniform(kb, (D,), dtype=jnp.float32, minval=-bound, maxval=bound)

    # One-time parameter fusion / padding (hoisted out of the per-call path).
    w_p, b_p = fuse_params(w, b)
    w_p, b_p = jax.block_until_ready((w_p, b_p))

    # Small-batch case (matches the original spec's batch=5).
    out = jax.block_until_ready(model_forward(x, w_p, b_p))
    ref = _reference(x, w, b)
    assert out.shape == (M, D)
    assert jnp.allclose(out, ref, atol=1e-5, rtol=1e-5), "mismatch vs reference (small batch)"

    # Larger-batch case to exercise the multi-step 'parallel' grid path.
    M2 = 1027
    x2 = jax.random.normal(kx2, (M2, D), dtype=jnp.float32)
    out2 = jax.block_until_ready(model_forward(x2, w_p, b_p))
    ref2 = _reference(x2, w, b)
    assert out2.shape == (M2, D)
    assert jnp.allclose(out2, ref2, atol=1e-4, rtol=1e-4), "mismatch vs reference (large batch)"

    print("KERNEL_OK")
</pallas_src>

<mosaic_0001>
module attributes {stable_mosaic.version = 11 : i64} {
  func.func @_fused_linear_kernel(%arg0: i32, %arg1: memref<8x128xf32, #tpu.memory_space<vmem>>, %arg2: memref<128x128xf32, #tpu.memory_space<vmem>>, %arg3: memref<1x128xf32, #tpu.memory_space<vmem>>, %arg4: memref<8x128xf32, #tpu.memory_space<vmem>>) attributes {dimension_semantics = [#tpu.dimension_semantics<parallel>], iteration_bounds = array<i64: 1>, scalar_prefetch = 0 : i64, scratch_operands = 0 : i64, tpu.core_type = #tpu.core_type<tc>, window_params = [{transform_indices = @transform_0, window_bounds = array<i64: 8, 128>}, {pipeline_mode = #tpu.pipeline_mode<synchronous>, transform_indices = @transform_1, window_bounds = array<i64: 128, 128>}, {pipeline_mode = #tpu.pipeline_mode<synchronous>, transform_indices = @transform_2, window_bounds = array<i64: 1, 128>}, {transform_indices = @transform_3, window_bounds = array<i64: 8, 128>}]} {
    %c0 = arith.constant 0 : index
    %c0_0 = arith.constant 0 : index
    %0 = vector.load %arg1[%c0, %c0_0] : memref<8x128xf32, #tpu.memory_space<vmem>>, vector<8x128xf32>
    %c0_1 = arith.constant 0 : index
    %c0_2 = arith.constant 0 : index
    %1 = vector.load %arg2[%c0_1, %c0_2] : memref<128x128xf32, #tpu.memory_space<vmem>>, vector<128x128xf32>
    %cst = arith.constant dense<0.000000e+00> : vector<8x128xf32>
    %2 = tpu.matmul %0, %1, %cst {dimension_numbers = #tpu.dot_dimension_numbers<[1], [0], [0], [1], [0, 0, 1, 1], [], []>} : vector<8x128xf32>, vector<128x128xf32>, vector<8x128xf32> -> vector<8x128xf32>
    %c0_3 = arith.constant 0 : index
    %c0_4 = arith.constant 0 : index
    %3 = vector.load %arg3[%c0_3, %c0_4] : memref<1x128xf32, #tpu.memory_space<vmem>>, vector<1x128xf32>
    %4 = vector.broadcast %3 : vector<1x128xf32> to vector<8x128xf32>
    %5 = arith.addf %2, %4 : vector<8x128xf32>
    %c0_5 = arith.constant 0 : index
    %c0_6 = arith.constant 0 : index
    %6 = vector.load %arg4[%c0_5, %c0_6] : memref<8x128xf32, #tpu.memory_space<vmem>>, vector<8x128xf32>
    tpu.vector_store %arg4[%c0_5, %c0_6], %5 {strides = array<i32>} : memref<8x128xf32, #tpu.memory_space<vmem>>, vector<8x128xf32>,
    return
  }
  func.func @transform_0(%arg0: i32) -> (i32, i32) {
    %c0_i32 = arith.constant 0 : i32
    %c0_i32_0 = arith.constant 0 : i32
    return %arg0, %c0_i32 : i32, i32
  }
  func.func @transform_1(%arg0: i32) -> (i32, i32) {
    %c0_i32 = arith.constant 0 : i32
    %c0_i32_0 = arith.constant 0 : i32
    %c0_i32_1 = arith.constant 0 : i32
    return %c0_i32, %c0_i32_0 : i32, i32
  }
  func.func @transform_2(%arg0: i32) -> (i32, i32) {
    %c0_i32 = arith.constant 0 : i32
    %c0_i32_0 = arith.constant 0 : i32
    %c0_i32_1 = arith.constant 0 : i32
    return %c0_i32, %c0_i32_0 : i32, i32
  }
  func.func @transform_3(%arg0: i32) -> (i32, i32) {
    %c0_i32 = arith.constant 0 : i32
    %c0_i32_0 = arith.constant 0 : i32
    return %arg0, %c0_i32 : i32, i32
  }
}

</mosaic_0001>

<llo_original>
// kernel: model_forward.1
$region0: #{model_forward.1}
  #allocation0 [shape = 'u32[]', space=smem, size = 0x4, offset = 0x4, fixed_abs, tag = 'smem constant byte address 0x4 - core index']
  #allocation1 [shape = 'u32[144,128]{1,0:T(1,128)}', space=vmem, size = 0x12000, scoped, tag = 'internal scratch']
  %s0 = inlined_call_operand.vmem [shape: f32[8,128], index: 0, kind: input, shape index: {}]
  %s1 = inlined_call_operand.hbm [shape: f32[128,128], index: 1, kind: input, shape index: {}]
  %s2 = inlined_call_operand.vmem [shape: f32[1,128], index: 2, kind: input, shape index: {}]
  %s3 = inlined_call_operand.hbm [shape: f32[8,128], index: 3, kind: output, shape index: {}]
  %s4 = sld [smem:[#allocation0]]
  $region26: #{model_forward.1} parent=0
    _
  %s6 = ssub.s32 1, %s4
  %s7 = scalar_select 0, %s6, %s4
  $region1: #{model_forward.1} parent=0
    #allocation2 [shape = 'u8[65536]{0}', space=vmem, size = 0x10000, scoped, tag = 'input window, operand 1, single buffered']
    #allocation3 [shape = 's32[1]{0}', space=sflag, size = 0x4, scoped, tag = 'scoped memory for model_forward.1']
    #allocation4 [shape = 's32[1]{0}', space=sflag, size = 0x4, scoped, tag = 'scoped memory for model_forward.1']
    #allocation5 [shape = 'u8[4096]{0}', space=vmem, size = 0x1000, scoped, tag = 'output window, operand 0, single buffered']
    %8 = vsyncpa [#allocation3], 0
    %9 = vsyncpa [#allocation4], 0
    // Predicated region
    $region2: #{model_forward.1} parent=1 // pred_check
      _
    $region3: #{model_forward.1} parent=1 // pred_check_branch
      %11 = sbr.rel (0) target = $region5
    $region4: #{model_forward.1} parent=1 // pred_region
      _
    $region5: #{model_forward.1} parent=1 // pred_fallthru
      _
    // Predicated region
    $region6: #{model_forward.1} parent=1 // pred_check
      _
    $region7: #{model_forward.1} parent=1 // pred_check_branch
      %13 = sbr.rel (0) target = $region9
    $region8: #{model_forward.1} parent=1 // pred_region
      %s15 = ssub.s32 2048, 2048
      %16 = vsyncadd [#allocation3], %s15
      %s17 = sshll.u32 [#allocation2], 4
      %s18 = int_to_ptr.vmem [resolvable:$true] %s17
      %23 = dma.hbm_to_vmem [thread:$0]  %s1, 2048, %s18, [#allocation3], 128, 128, 8
    $region9: #{model_forward.1} parent=1 // pred_fallthru
      _
    // Predicated region
    $region10: #{model_forward.1} parent=1 // pred_check
      _
    $region11: #{model_forward.1} parent=1 // pred_check_branch
      %25 = sbr.rel (0) target = $region13
    $region12: #{model_forward.1} parent=1 // pred_region
      _
    $region13: #{model_forward.1} parent=1 // pred_fallthru
      _
    // Predicated region
    $region14: #{model_forward.1} parent=1 // pred_check
      _
    $region15: #{model_forward.1} parent=1 // pred_check_branch
      %27 = sbr.rel (0) target = $region17
    $region16: #{model_forward.1} parent=1 // pred_region
      %28 = dma.done [#allocation3], 2048
    $region17: #{model_forward.1} parent=1 // pred_fallthru
      _
    %v29 = vld [vmem:[%s0] sm:$0xff]
    %v30 = vld [vmem:[#allocation2] sm:$0xff]
    %v31 = vld [vmem:[#allocation2 + $0x8] sm:$0xff]
    %v32 = vld [vmem:[#allocation2 + $0x10] sm:$0xff]
    %v33 = vld [vmem:[#allocation2 + $0x18] sm:$0xff]
    %v34 = vld [vmem:[#allocation2 + $0x20] sm:$0xff]
    %v35 = vld [vmem:[#allocation2 + $0x28] sm:$0xff]
    %v36 = vld [vmem:[#allocation2 + $0x30] sm:$0xff]
    %v37 = vld [vmem:[#allocation2 + $0x38] sm:$0xff]
    %v38 = vld [vmem:[#allocation2 + $0x40] sm:$0xff]
    %v39 = vld [vmem:[#allocation2 + $0x48] sm:$0xff]
    %v40 = vld [vmem:[#allocation2 + $0x50] sm:$0xff]
    %v41 = vld [vmem:[#allocation2 + $0x58] sm:$0xff]
    %v42 = vld [vmem:[#allocation2 + $0x60] sm:$0xff]
    %v43 = vld [vmem:[#allocation2 + $0x68] sm:$0xff]
    %v44 = vld [vmem:[#allocation2 + $0x70] sm:$0xff]
    %v45 = vld [vmem:[#allocation2 + $0x78] sm:$0xff]
    %v46 = vld [vmem:[%s2] sm:$0x1]
    %v48 = vlaneseq
    %v49 = vshrl.u32 %v48, 7
    %v50 = vsub.s32 0, %v49
    %v51 = vrot.slane %v46, %v50
    %53 = vmatprep.subr.mxu0 0.0
    %54 = vmatpush1.msra.mxu0 %v45
    %55 = vmatprep.subr.mxu0 0.0
    %56 = vmatpush1.msra.mxu0 %v44
    %57 = vmatprep.subr.mxu0 0.0
    %58 = vmatpush1.msra.mxu0 %v43
    %59 = vmatprep.subr.mxu0 0.0
    %60 = vmatpush1.msra.mxu0 %v42
    %61 = vmatprep.subr.mxu0 0.0
    %62 = vmatpush1.msra.mxu0 %v41
    %63 = vmatprep.subr.mxu0 0.0
    %64 = vmatpush1.msra.mxu0 %v40
    %65 = vmatprep.subr.mxu0 0.0
    %66 = vmatpush1.msra.mxu0 %v39
    %67 = vmatprep.subr.mxu0 0.0
    %68 = vmatpush1.msra.mxu0 %v38
    %69 = vmatprep.subr.mxu0 0.0
    %70 = vmatpush1.msra.mxu0 %v37
    %71 = vmatprep.subr.mxu0 0.0
    %72 = vmatpush1.msra.mxu0 %v36
    %73 = vmatprep.subr.mxu0 0.0
    %74 = vmatpush1.msra.mxu0 %v35
    %75 = vmatprep.subr.mxu0 0.0
    %76 = vmatpush1.msra.mxu0 %v34
    %77 = vmatprep.subr.mxu0 0.0
    %78 = vmatpush1.msra.mxu0 %v33
    %79 = vmatprep.subr.mxu0 0.0
    %80 = vmatpush1.msra.mxu0 %v32
    %81 = vmatprep.subr.mxu0 0.0
    %82 = vmatpush1.msra.mxu0 %v31
    %83 = vmatprep.subr.mxu0 0.0
    %84 = vmatpush1.msra.mxu0 %v30
    %85 = vmatprep.subr.mxu0 0.0
    %86 = vmatpush2.msra.mxu0 0.0
    %87 = vmatprep.subr.mxu0 0.0
    %88 = vmatpush2.msra.mxu0 0.0
    %89 = vmatprep.subr.mxu0 0.0
    %90 = vmatpush2.msra.mxu0 0.0
    %91 = vmatprep.subr.mxu0 0.0
    %92 = vmatpush2.msra.mxu0 0.0
    %93 = vmatprep.subr.mxu0 0.0
    %94 = vmatpush2.msra.mxu0 0.0
    %95 = vmatprep.subr.mxu0 0.0
    %96 = vmatpush2.msra.mxu0 0.0
    %97 = vmatprep.subr.mxu0 0.0
    %98 = vmatpush2.msra.mxu0 0.0
    %99 = vmatprep.subr.mxu0 0.0
    %100 = vmatpush2.msra.mxu0 0.0
    %101 = vmatprep.subr.mxu0 0.0
    %102 = vmatpush2.msra.mxu0 0.0
    %103 = vmatprep.subr.mxu0 0.0
    %104 = vmatpush2.msra.mxu0 0.0
    %105 = vmatprep.subr.mxu0 0.0
    %106 = vmatpush2.msra.mxu0 0.0
    %107 = vmatprep.subr.mxu0 0.0
    %108 = vmatpush2.msra.mxu0 0.0
    %109 = vmatprep.subr.mxu0 0.0
    %110 = vmatpush2.msra.mxu0 0.0
    %111 = vmatprep.subr.mxu0 0.0
    %112 = vmatpush2.msra.mxu0 0.0
    %113 = vmatprep.subr.mxu0 0.0
    %114 = vmatpush2.msra.mxu0 0.0
    %115 = vmatprep.subr.mxu0 0.0
    %116 = vmatpush2.msra.mxu0 0.0
    %117 = vmatprep.mubr.f32.mxu0 0.0
    %118 = vmatmul.mubr.f32.gmra.mxu0 %v29
    %v119 = vpop.f32.mrf.mxu0
    %v120 = vadd.f32 %v51, %v119
    %v121 = vpop.f32.mrf.mxu0
    %122 = vdwg.mxu0
    %123 = vst [vmem:[#allocation5] sm:$0xff] %v120
    // Predicated region
    $region18: #{model_forward.1} parent=1 // pred_check
      _
    $region19: #{model_forward.1} parent=1 // pred_check_branch
      %125 = sbr.rel (0) target = $region21
    $region20: #{model_forward.1} parent=1 // pred_region
      %s127 = ssub.s32 128, 128
      %128 = vsyncadd [#allocation4], %s127
      %s130 = sshll.u32 [#allocation5], 4
      %s131 = int_to_ptr.vmem [resolvable:$true] %s130
      %133 = dma.vmem_to_hbm [thread:$0]  %s131, 128, %s3, [#allocation4]
    $region21: #{model_forward.1} parent=1 // pred_fallthru
      _
    // Predicated region
    $region22: #{model_forward.1} parent=1 // pred_check
      _
    $region23: #{model_forward.1} parent=1 // pred_check_branch
      %135 = sbr.rel (0) target = $region25
    $region24: #{model_forward.1} parent=1 // pred_region
      %136 = dma.done [#allocation4], 128
    $region25: #{model_forward.1} parent=1 // pred_fallthru
      _
    %137 = vsyncpa [#allocation3], 1
    %138 = vsyncpa [#allocation4], 1

</llo_original>
